<compile_context>
chip_gen: v5e
topology: v5e:2x2
jax: 0.10.0
libtpu: 0.0.40
codegen_flags: <defaults>
</compile_context>

<pallas_src>
import jax
import jax.numpy as jnp
import numpy as np
from jax.experimental import pallas as pl
from jax.experimental.pallas import tpu as pltpu


def _round_up(x, m):
    return ((x + m - 1) // m) * m


def _graph_kernel(off_ref, ef_ref, dstr_ref, w1_ref, b1_ref, w2_ref, b2_ref,
                  out_ref, m_sc, l_sc, acc_sc):
    del off_ref                              # only consumed by the index_maps
    e = pl.program_id(1)
    e_last = pl.num_programs(1) - 1
    n_tile = out_ref.shape[0]
    two_h = w1_ref.shape[1]
    mxu = w1_ref.dtype                       # bf16 (default) or f32 MXU operands
    f32 = jnp.float32

    @pl.when(e == 0)
    def _init():
        # attention >= 0 after ReLU, so 0 is a valid initial running max
        # (l == acc == 0 also makes the first alpha-rescale a no-op).
        m_sc[...] = jnp.zeros_like(m_sc)
        l_sc[...] = jnp.zeros_like(l_sc)
        acc_sc[...] = jnp.zeros_like(acc_sc)

    # attention = relu(Linear1(cat(src, dst)))  -- MXU matmul, f32 accumulate.
    ef = ef_ref[...]                                                      # [Et, 2C]
    attn = jnp.dot(ef.astype(mxu), w1_ref[...],
                   preferred_element_type=f32) + b1_ref[...]
    attn = jnp.maximum(attn, 0.0)                                         # [Et, 2H] >= 0

    # Per-channel tile upper bound (>= every edge's attention in this block).
    # Any per-destination upper bound keeps the online-softmax algebra exact;
    # a per-channel one avoids the expensive [Nt, Et, 2H] masked max entirely
    # and makes the running max destination-independent ([1, 2H] scratch).
    blk_ub = jnp.max(attn, axis=0, keepdims=True)                         # [1, 2H]
    m_old = m_sc[...]
    m_new = jnp.maximum(m_old, blk_ub)                                    # [1, 2H]
    alpha = jnp.exp(m_old - m_new)                                        # [1, 2H]
    m_sc[...] = m_new

    ex = jnp.exp(attn - m_new)                                            # [Et, 2H], <= 1

    # One-hot destination membership for this N tile, built directly in the
    # MXU dtype (exact for 0/1).  Edges belonging to other tiles and padding
    # edges (dst == -1) simply never match.
    n_start = pl.program_id(0) * n_tile
    row_ids = jax.lax.broadcasted_iota(jnp.int32, (n_tile, 1), 0) + n_start
    mask_c = (row_ids == dstr_ref[...]).astype(mxu)                       # [Nt, Et]

    # Fused one-hot accumulation: one MXU matmul produces both the softmax
    # denominator and the weighted-feature numerator.
    rhs = jnp.concatenate([ex, ex * ef.astype(f32)], axis=-1).astype(mxu)  # [Et, 2H+2C]
    upd = jnp.dot(mask_c, rhs, preferred_element_type=f32)                 # [Nt, 2H+2C]

    l_sc[...] = alpha * l_sc[...] + upd[:, :two_h]
    acc_sc[...] = alpha * acc_sc[...] + upd[:, two_h:]

    @pl.when(e == e_last)
    def _finalize():
        l = l_sc[...]
        inv = pl.reciprocal(l, approx=True)          # EUP slot
        inv = inv * (2.0 - l * inv)                  # one Newton step
        new_feat = jnp.where(l > 0.0, acc_sc[...] * inv, 0.0)   # 0 in-degree -> 0
        out_ref[...] = jnp.dot(new_feat.astype(mxu), w2_ref[...],
                               preferred_element_type=f32) + b2_ref[...]


def graph_model_forward(features, src_id, dst_id, params, *,
                        n_tile=256, e_tile=512,
                        mxu_dtype=jnp.bfloat16, edge_dtype=jnp.bfloat16):
    """features: [N, in_c] f32; src_id/dst_id: [E] int; params = (w1, b1, w2, b2)."""
    w1, b1, w2, b2 = params                 # w1:[2C,2H] b1:[1,2H] w2:[2H,H] b2:[1,H]
    N, in_c = features.shape
    two_h = w1.shape[1]
    hid_c = w2.shape[1]
    assert w1.shape[0] == 2 * in_c
    # the original module computes `attention * features` -> needs hid_c == in_c
    assert two_h == 2 * in_c, "GraphModel requires hid_c == in_c"

    f32 = jnp.float32
    src_np = np.asarray(src_id).astype(np.int64)
    dst_np = np.asarray(dst_id).astype(np.int64)
    E = int(src_np.shape[0])
    assert E > 0

    e_tile = max(128, _round_up(min(e_tile, _round_up(E, 128)), 128))
    n_tile = max(8, _round_up(min(n_tile, _round_up(N, 8)), 8))
    N_pad = _round_up(N, n_tile)
    H_pad = _round_up(hid_c, 128)           # lane-dense output store
    num_n_tiles = N_pad // n_tile           # on v7x prefer an even tile count

    # ---- host-side graph preprocessing (static graph, like DGL's constructor) ----
    # Sort edges by destination; each N tile then only touches its own segment
    # of the edge stream via scalar-prefetched per-tile block offsets.
    order = np.argsort(dst_np, kind="stable")
    src_s, dst_s = src_np[order], dst_np[order]
    t_ids = np.arange(num_n_tiles, dtype=np.int64)
    starts = np.searchsorted(dst_s, t_ids * n_tile, side="left")
    ends = np.searchsorted(dst_s, (t_ids + 1) * n_tile, side="left")
    off_blk = starts // e_tile                                    # rounded-down block start
    nblk = np.maximum(1, -(-(ends - off_blk * e_tile) // e_tile))  # ceil, >= 1
    max_blocks = int(nblk.max())
    total_blocks = int(np.max(off_blk) + max_blocks)
    E_total = max(total_blocks * e_tile, _round_up(E, e_tile))
    pad_e = E_total - E

    src_pad = np.concatenate([src_s, np.zeros(pad_e, np.int64)])
    dst_pad = np.concatenate([dst_s, np.full(pad_e, -1, np.int64)])   # -1: never matches
    dst_gather = np.where(dst_pad < 0, 0, dst_pad)

    feat_p = jnp.zeros((N_pad, in_c), f32).at[:N].set(features.astype(f32))
    # TODO(synk): gather endpoint rows in-kernel (manual DMA from HBM) to drop
    # this host-side O(E * 2C) edge-feature materialization.
    edge_feat = jnp.concatenate(
        [jnp.take(feat_p, jnp.asarray(src_pad, jnp.int32), axis=0),
         jnp.take(feat_p, jnp.asarray(dst_gather, jnp.int32), axis=0)],
        axis=-1).astype(edge_dtype)                                    # [E_total, 2C]
    dst_row = jnp.asarray(dst_pad, jnp.int32).reshape(1, E_total)
    off_arr = jnp.asarray(off_blk, jnp.int32)                          # scalar prefetch

    w1c = w1.astype(mxu_dtype)
    w2c = jnp.zeros((two_h, H_pad), mxu_dtype).at[:, :hid_c].set(w2.astype(mxu_dtype))
    b1c = b1.astype(f32).reshape(1, two_h)
    b2c = jnp.zeros((1, H_pad), f32).at[:, :hid_c].set(b2.astype(f32).reshape(1, hid_c))

    grid = (num_n_tiles, max_blocks)

    out = pl.pallas_call(
        _graph_kernel,
        out_shape=jax.ShapeDtypeStruct((N_pad, H_pad), f32),
        grid_spec=pltpu.PrefetchScalarGridSpec(
            num_scalar_prefetch=1,
            grid=grid,
            in_specs=[
                # edge features / dst ids: block picked from this tile's segment
                pl.BlockSpec((e_tile, 2 * in_c), lambda n, e, off: (off[n] + e, 0)),
                pl.BlockSpec((1, e_tile), lambda n, e, off: (0, off[n] + e)),
                # weights (constant index -> fetched once; default buffering kept
                # for robustness instead of pl.Buffered(1))
                pl.BlockSpec((2 * in_c, two_h), lambda n, e, off: (0, 0)),   # w1
                pl.BlockSpec((1, two_h), lambda n, e, off: (0, 0)),          # b1
                pl.BlockSpec((two_h, H_pad), lambda n, e, off: (0, 0)),      # w2 (padded)
                pl.BlockSpec((1, H_pad), lambda n, e, off: (0, 0)),          # b2 (padded)
            ],
            out_specs=pl.BlockSpec((n_tile, H_pad), lambda n, e, off: (n, 0)),
            scratch_shapes=[
                pltpu.VMEM((1, two_h), f32),           # running per-channel max
                pltpu.VMEM((n_tile, two_h), f32),      # running softmax denom
                pltpu.VMEM((n_tile, 2 * in_c), f32),   # running numerator
            ],
        ),
        compiler_params=pltpu.CompilerParams(
            dimension_semantics=("parallel", "arbitrary"),
            vmem_limit_bytes=48 * 1024 * 1024,   # fits v7x's 64 MiB physical VMEM
        ),
    )(off_arr, edge_feat, dst_row, w1c, b1c, w2c, b2c)

    return out[:N, :hid_c]


def reference_forward(features, src_id, dst_id, params):
    """Pure-JAX reference matching DGL mailbox semantics (per-dst softmax)."""
    w1, b1, w2, b2 = params
    N = features.shape[0]
    ef = jnp.concatenate([features[src_id], features[dst_id]], axis=-1)
    attn = jax.nn.relu(ef @ w1 + b1)
    seg_max = jax.ops.segment_max(attn, dst_id, num_segments=N)
    ex = jnp.exp(attn - seg_max[dst_id])
    seg_sum = jax.ops.segment_sum(ex, dst_id, num_segments=N)
    w = ex / seg_sum[dst_id]
    new_feat = jax.ops.segment_sum(w * ef, dst_id, num_segments=N)
    return new_feat @ w2 + b2


def init_params(key, in_c, hid_c):
    """Deterministic nn.Linear-style init (uniform(-1/sqrt(fan_in), 1/sqrt(fan_in)))."""
    k1, k2, k3, k4 = jax.random.split(key, 4)
    f1, f2 = 2 * in_c, 2 * hid_c
    bound1 = 1.0 / np.sqrt(f1)
    bound2 = 1.0 / np.sqrt(f2)
    w1 = jax.random.uniform(k1, (f1, f2), jnp.float32, -bound1, bound1)     # Linear(2C,2H).weight.T
    b1 = jax.random.uniform(k2, (1, f2), jnp.float32, -bound1, bound1)
    w2 = jax.random.uniform(k3, (f2, hid_c), jnp.float32, -bound2, bound2)  # Linear(2H,H).weight.T
    b2 = jax.random.uniform(k4, (1, hid_c), jnp.float32, -bound2, bound2)
    return w1, b1, w2, b2


if __name__ == "__main__":
    N, in_c, hid_c = 16, 16, 16
    key = jax.random.PRNGKey(0)
    k_feat, k_par, k_edge = jax.random.split(key, 3)
    features = jax.random.normal(k_feat, (N, in_c), dtype=jnp.float32)
    params = init_params(k_par, in_c, hid_c)

    # Graph A: fully connected directed graph (256 edges, in-degree 16).
    src_a = jnp.repeat(jnp.arange(N, dtype=jnp.int32), N)
    dst_a = jnp.tile(jnp.arange(N, dtype=jnp.int32), N)
    ref_a = reference_forward(features, src_a, dst_a, params)

    # (1) two N tiles (parallel axis + per-tile offset indexing), f32 tight check.
    out1 = jax.block_until_ready(graph_model_forward(
        features, src_a, dst_a, params, n_tile=8, e_tile=128,
        mxu_dtype=jnp.float32, edge_dtype=jnp.float32))
    np.testing.assert_allclose(np.asarray(out1), np.asarray(ref_a), rtol=5e-4, atol=5e-4)

    # (2) one N tile spanning two E blocks -> exercises the online cross-block
    #     softmax merge, f32 tight check.
    out2 = jax.block_until_ready(graph_model_forward(
        features, src_a, dst_a, params, n_tile=16, e_tile=128,
        mxu_dtype=jnp.float32, edge_dtype=jnp.float32))
    np.testing.assert_allclose(np.asarray(out2), np.asarray(ref_a), rtol=5e-4, atol=5e-4)

    # Graph B: random graph with guaranteed self-loops (every node has >= 1
    # incoming edge), unaligned per-tile edge segments -> exercises the
    # rounded-down block starts, cross-tile masking and padding edges,
    # on the bf16 (perf-default) path.
    E_rnd = 240
    src_b = jnp.concatenate([jnp.arange(N, dtype=jnp.int32),
                             jax.random.randint(k_edge, (E_rnd,), 0, N, jnp.int32)])
    dst_b = jnp.concatenate([jnp.arange(N, dtype=jnp.int32),
                             jax.random.randint(jax.random.fold_in(k_edge, 1),
                                                (E_rnd,), 0, N, jnp.int32)])
    ref_b = reference_forward(features, src_b, dst_b, params)
    out3 = jax.block_until_ready(graph_model_forward(
        features, src_b, dst_b, params, n_tile=8, e_tile=128,
        mxu_dtype=jnp.bfloat16, edge_dtype=jnp.bfloat16))
    np.testing.assert_allclose(np.asarray(out3), np.asarray(ref_b), rtol=5e-2, atol=5e-2)

    print("KERNEL_OK")
</pallas_src>

<mosaic_0001>
module attributes {stable_mosaic.version = 11 : i64} {
  func.func @_graph_kernel(%arg0: i32, %arg1: i32, %arg2: memref<2xi32, #tpu.memory_space<smem>>, %arg3: memref<128x32xf32, #tpu.memory_space<vmem>>, %arg4: memref<1x128xi32, #tpu.memory_space<vmem>>, %arg5: memref<32x32xf32, #tpu.memory_space<vmem>>, %arg6: memref<1x32xf32, #tpu.memory_space<vmem>>, %arg7: memref<32x128xf32, #tpu.memory_space<vmem>>, %arg8: memref<1x128xf32, #tpu.memory_space<vmem>>, %arg9: memref<8x128xf32, #tpu.memory_space<vmem>>, %arg10: memref<1x32xf32, #tpu.memory_space<vmem>>, %arg11: memref<8x32xf32, #tpu.memory_space<vmem>>, %arg12: memref<8x32xf32, #tpu.memory_space<vmem>>) attributes {dimension_semantics = [#tpu.dimension_semantics<parallel>, #tpu.dimension_semantics<arbitrary>], iteration_bounds = array<i64: 2, 1>, scalar_prefetch = 1 : i64, scratch_operands = 3 : i64, tpu.core_type = #tpu.core_type<tc>, window_params = [{transform_indices = @transform_0, window_bounds = array<i64: 128, 32>}, {transform_indices = @transform_1, window_bounds = array<i64: 1, 128>}, {pipeline_mode = #tpu.pipeline_mode<synchronous>, transform_indices = @transform_2, window_bounds = array<i64: 32, 32>}, {pipeline_mode = #tpu.pipeline_mode<synchronous>, transform_indices = @transform_3, window_bounds = array<i64: 1, 32>}, {pipeline_mode = #tpu.pipeline_mode<synchronous>, transform_indices = @transform_4, window_bounds = array<i64: 32, 128>}, {pipeline_mode = #tpu.pipeline_mode<synchronous>, transform_indices = @transform_5, window_bounds = array<i64: 1, 128>}, {transform_indices = @transform_6, window_bounds = array<i64: 8, 128>}]} {
    %c0_i32 = arith.constant 0 : i32
    %0 = arith.cmpi eq, %arg1, %c0_i32 : i32
    %1 = arith.extui %0 : i1 to i32
    %c0_i32_0 = arith.constant 0 : i32
    %2 = arith.cmpi ne, %1, %c0_i32_0 : i32
    scf.if %2 {
      %cst_25 = arith.constant 0.000000e+00 : f32
      %49 = vector.broadcast %cst_25 : f32 to vector<1x32xf32>
      %c0_26 = arith.constant 0 : index
      %c0_27 = arith.constant 0 : index
      %50 = vector.load %arg10[%c0_26, %c0_27] : memref<1x32xf32, #tpu.memory_space<vmem>>, vector<1x32xf32>
      tpu.vector_store %arg10[%c0_26, %c0_27], %49 {strides = array<i32>} : memref<1x32xf32, #tpu.memory_space<vmem>>, vector<1x32xf32>,
      %cst_28 = arith.constant 0.000000e+00 : f32
      %51 = vector.broadcast %cst_28 : f32 to vector<8x32xf32>
      %c0_29 = arith.constant 0 : index
      %c0_30 = arith.constant 0 : index
      %52 = vector.load %arg11[%c0_29, %c0_30] : memref<8x32xf32, #tpu.memory_space<vmem>>, vector<8x32xf32>
      tpu.vector_store %arg11[%c0_29, %c0_30], %51 {strides = array<i32>} : memref<8x32xf32, #tpu.memory_space<vmem>>, vector<8x32xf32>,
      %cst_31 = arith.constant 0.000000e+00 : f32
      %53 = vector.broadcast %cst_31 : f32 to vector<8x32xf32>
      %c0_32 = arith.constant 0 : index
      %c0_33 = arith.constant 0 : index
      %54 = vector.load %arg12[%c0_32, %c0_33] : memref<8x32xf32, #tpu.memory_space<vmem>>, vector<8x32xf32>
      tpu.vector_store %arg12[%c0_32, %c0_33], %53 {strides = array<i32>} : memref<8x32xf32, #tpu.memory_space<vmem>>, vector<8x32xf32>,
    } else {
    }
    %c0 = arith.constant 0 : index
    %c0_1 = arith.constant 0 : index
    %3 = vector.load %arg3[%c0, %c0_1] : memref<128x32xf32, #tpu.memory_space<vmem>>, vector<128x32xf32>
    %c0_2 = arith.constant 0 : index
    %c0_3 = arith.constant 0 : index
    %4 = vector.load %arg5[%c0_2, %c0_3] : memref<32x32xf32, #tpu.memory_space<vmem>>, vector<32x32xf32>
    %cst = arith.constant dense<0.000000e+00> : vector<128x32xf32>
    %5 = tpu.matmul %3, %4, %cst {dimension_numbers = #tpu.dot_dimension_numbers<[1], [0], [0], [1], [0, 0, 1, 1], [], []>} : vector<128x32xf32>, vector<32x32xf32>, vector<128x32xf32> -> vector<128x32xf32>
    %c0_4 = arith.constant 0 : index
    %c0_5 = arith.constant 0 : index
    %6 = vector.load %arg6[%c0_4, %c0_5] : memref<1x32xf32, #tpu.memory_space<vmem>>, vector<1x32xf32>
    %7 = vector.broadcast %6 : vector<1x32xf32> to vector<128x32xf32>
    %8 = arith.addf %5, %7 : vector<128x32xf32>
    %cst_6 = arith.constant 0.000000e+00 : f32
    %9 = vector.broadcast %cst_6 : f32 to vector<128x32xf32>
    %10 = arith.maximumf %8, %9 : vector<128x32xf32>
    %cst_7 = arith.constant dense<0xFF800000> : vector<32xf32>
    %11 = vector.multi_reduction <maximumf>, %10, %cst_7 [0] : vector<128x32xf32> to vector<32xf32>
    %12 = vector.shape_cast %11 : vector<32xf32> to vector<1x32xf32>
    %c0_8 = arith.constant 0 : index
    %c0_9 = arith.constant 0 : index
    %13 = vector.load %arg10[%c0_8, %c0_9] : memref<1x32xf32, #tpu.memory_space<vmem>>, vector<1x32xf32>
    %14 = arith.maximumf %13, %12 : vector<1x32xf32>
    %15 = arith.subf %13, %14 : vector<1x32xf32>
    %16 = math.exp %15 : vector<1x32xf32>
    %c0_10 = arith.constant 0 : index
    %c0_11 = arith.constant 0 : index
    %17 = vector.load %arg10[%c0_10, %c0_11] : memref<1x32xf32, #tpu.memory_space<vmem>>, vector<1x32xf32>
    tpu.vector_store %arg10[%c0_10, %c0_11], %14 {strides = array<i32>} : memref<1x32xf32, #tpu.memory_space<vmem>>, vector<1x32xf32>,
    %18 = vector.broadcast %14 : vector<1x32xf32> to vector<128x32xf32>
    %19 = arith.subf %10, %18 : vector<128x32xf32>
    %20 = math.exp %19 : vector<128x32xf32>
    %c8_i32 = arith.constant 8 : i32
    %21 = arith.muli %arg0, %c8_i32 : i32
    %22 = tpu.iota {dimensions = array<i32: 0>} : vector<8x1xi32>
    %23 = vector.broadcast %21 : i32 to vector<8x1xi32>
    %24 = arith.addi %22, %23 : vector<8x1xi32>
    %c0_12 = arith.constant 0 : index
    %c0_13 = arith.constant 0 : index
    %25 = vector.load %arg4[%c0_12, %c0_13] : memref<1x128xi32, #tpu.memory_space<vmem>>, vector<1x128xi32>
    %26 = vector.broadcast %24 : vector<8x1xi32> to vector<8x128xi32>
    %27 = vector.broadcast %25 : vector<1x128xi32> to vector<8x128xi32>
    %28 = arith.cmpi eq, %26, %27 : vector<8x128xi32>
    %29 = arith.extui %28 : vector<8x128xi1> to vector<8x128xi32>
    %30 = arith.sitofp %29 : vector<8x128xi32> to vector<8x128xf32>
    %31 = arith.mulf %20, %3 : vector<128x32xf32>
    %32 = tpu.concatenate %20, %31 in 1 : vector<128x32xf32>, vector<128x32xf32> -> vector<128x64xf32>
    %cst_14 = arith.constant dense<0.000000e+00> : vector<8x64xf32>
    %33 = tpu.matmul %30, %32, %cst_14 {dimension_numbers = #tpu.dot_dimension_numbers<[1], [0], [0], [1], [0, 0, 1, 1], [], []>} : vector<8x128xf32>, vector<128x64xf32>, vector<8x64xf32> -> vector<8x64xf32>
    %c0_15 = arith.constant 0 : index
    %c0_16 = arith.constant 0 : index
    %34 = vector.load %arg11[%c0_15, %c0_16] : memref<8x32xf32, #tpu.memory_space<vmem>>, vector<8x32xf32>
    %35 = vector.broadcast %16 : vector<1x32xf32> to vector<8x32xf32>
    %36 = arith.mulf %35, %34 : vector<8x32xf32>
    %37 = vector.extract_strided_slice %33 {offsets = [0, 0], sizes = [8, 32], strides = [1, 1]} : vector<8x64xf32> to vector<8x32xf32>
    %38 = arith.addf %36, %37 : vector<8x32xf32>
    %c0_17 = arith.constant 0 : index
    %c0_18 = arith.constant 0 : index
    %39 = vector.load %arg11[%c0_17, %c0_18] : memref<8x32xf32, #tpu.memory_space<vmem>>, vector<8x32xf32>
    tpu.vector_store %arg11[%c0_17, %c0_18], %38 {strides = array<i32>} : memref<8x32xf32, #tpu.memory_space<vmem>>, vector<8x32xf32>,
    %c0_19 = arith.constant 0 : index
    %c0_20 = arith.constant 0 : index
    %40 = vector.load %arg12[%c0_19, %c0_20] : memref<8x32xf32, #tpu.memory_space<vmem>>, vector<8x32xf32>
    %41 = vector.broadcast %16 : vector<1x32xf32> to vector<8x32xf32>
    %42 = arith.mulf %41, %40 : vector<8x32xf32>
    %43 = vector.extract_strided_slice %33 {offsets = [0, 32], sizes = [8, 32], strides = [1, 1]} : vector<8x64xf32> to vector<8x32xf32>
    %44 = arith.addf %42, %43 : vector<8x32xf32>
    %c0_21 = arith.constant 0 : index
    %c0_22 = arith.constant 0 : index
    %45 = vector.load %arg12[%c0_21, %c0_22] : memref<8x32xf32, #tpu.memory_space<vmem>>, vector<8x32xf32>
    tpu.vector_store %arg12[%c0_21, %c0_22], %44 {strides = array<i32>} : memref<8x32xf32, #tpu.memory_space<vmem>>, vector<8x32xf32>,
    %c0_i32_23 = arith.constant 0 : i32
    %46 = arith.cmpi eq, %arg1, %c0_i32_23 : i32
    %47 = arith.extui %46 : i1 to i32
    %c0_i32_24 = arith.constant 0 : i32
    %48 = arith.cmpi ne, %47, %c0_i32_24 : i32
    scf.if %48 {
      %c0_25 = arith.constant 0 : index
      %c0_26 = arith.constant 0 : index
      %49 = vector.load %arg11[%c0_25, %c0_26] : memref<8x32xf32, #tpu.memory_space<vmem>>, vector<8x32xf32>
      %50 = tpu.reciprocal %49 {approx = true} : vector<8x32xf32> -> vector<8x32xf32>
      %51 = arith.mulf %49, %50 : vector<8x32xf32>
      %cst_27 = arith.constant 2.000000e+00 : f32
      %52 = vector.broadcast %cst_27 : f32 to vector<8x32xf32>
      %53 = arith.subf %52, %51 : vector<8x32xf32>
      %54 = arith.mulf %50, %53 : vector<8x32xf32>
      %cst_28 = arith.constant 0.000000e+00 : f32
      %55 = vector.broadcast %cst_28 : f32 to vector<8x32xf32>
      %56 = arith.cmpf ogt, %49, %55 : vector<8x32xf32>
      %c0_29 = arith.constant 0 : index
      %c0_30 = arith.constant 0 : index
      %57 = vector.load %arg12[%c0_29, %c0_30] : memref<8x32xf32, #tpu.memory_space<vmem>>, vector<8x32xf32>
      %58 = arith.mulf %57, %54 : vector<8x32xf32>
      %cst_31 = arith.constant 0.000000e+00 : f32
      %59 = vector.broadcast %cst_31 : f32 to vector<8x32xf32>
      %60 = arith.select %56, %58, %59 : vector<8x32xi1>, vector<8x32xf32>
      %c0_32 = arith.constant 0 : index
      %c0_33 = arith.constant 0 : index
      %61 = vector.load %arg7[%c0_32, %c0_33] : memref<32x128xf32, #tpu.memory_space<vmem>>, vector<32x128xf32>
      %cst_34 = arith.constant dense<0.000000e+00> : vector<8x128xf32>
      %62 = tpu.matmul %60, %61, %cst_34 {dimension_numbers = #tpu.dot_dimension_numbers<[1], [0], [0], [1], [0, 0, 1, 1], [], []>} : vector<8x32xf32>, vector<32x128xf32>, vector<8x128xf32> -> vector<8x128xf32>
      %c0_35 = arith.constant 0 : index
      %c0_36 = arith.constant 0 : index
      %63 = vector.load %arg8[%c0_35, %c0_36] : memref<1x128xf32, #tpu.memory_space<vmem>>, vector<1x128xf32>
      %64 = vector.broadcast %63 : vector<1x128xf32> to vector<8x128xf32>
      %65 = arith.addf %62, %64 : vector<8x128xf32>
      %c0_37 = arith.constant 0 : index
      %c0_38 = arith.constant 0 : index
      %66 = vector.load %arg9[%c0_37, %c0_38] : memref<8x128xf32, #tpu.memory_space<vmem>>, vector<8x128xf32>
      tpu.vector_store %arg9[%c0_37, %c0_38], %65 {strides = array<i32>} : memref<8x128xf32, #tpu.memory_space<vmem>>, vector<8x128xf32>,
    } else {
    }
    return
  }
  func.func @transform_0(%arg0: i32, %arg1: i32, %arg2: memref<2xi32, #tpu.memory_space<smem>>) -> (i32, i32) {
    %0 = arith.index_cast %arg0 : i32 to index
    %1 = memref.load %arg2[%0] : memref<2xi32, #tpu.memory_space<smem>>
    %2 = arith.addi %1, %arg1 : i32
    %c0_i32 = arith.constant 0 : i32
    %c0_i32_0 = arith.constant 0 : i32
    return %2, %c0_i32 : i32, i32
  }
  func.func @transform_1(%arg0: i32, %arg1: i32, %arg2: memref<2xi32, #tpu.memory_space<smem>>) -> (i32, i32) {
    %0 = arith.index_cast %arg0 : i32 to index
    %1 = memref.load %arg2[%0] : memref<2xi32, #tpu.memory_space<smem>>
    %2 = arith.addi %1, %arg1 : i32
    %c0_i32 = arith.constant 0 : i32
    %c0_i32_0 = arith.constant 0 : i32
    return %c0_i32, %2 : i32, i32
  }
  func.func @transform_2(%arg0: i32, %arg1: i32, %arg2: memref<2xi32, #tpu.memory_space<smem>>) -> (i32, i32) {
    %c0_i32 = arith.constant 0 : i32
    %c0_i32_0 = arith.constant 0 : i32
    %c0_i32_1 = arith.constant 0 : i32
    return %c0_i32, %c0_i32_0 : i32, i32
  }
  func.func @transform_3(%arg0: i32, %arg1: i32, %arg2: memref<2xi32, #tpu.memory_space<smem>>) -> (i32, i32) {
    %c0_i32 = arith.constant 0 : i32
    %c0_i32_0 = arith.constant 0 : i32
    %c0_i32_1 = arith.constant 0 : i32
    return %c0_i32, %c0_i32_0 : i32, i32
  }
  func.func @transform_4(%arg0: i32, %arg1: i32, %arg2: memref<2xi32, #tpu.memory_space<smem>>) -> (i32, i32) {
    %c0_i32 = arith.constant 0 : i32
    %c0_i32_0 = arith.constant 0 : i32
    %c0_i32_1 = arith.constant 0 : i32
    return %c0_i32, %c0_i32_0 : i32, i32
  }
  func.func @transform_5(%arg0: i32, %arg1: i32, %arg2: memref<2xi32, #tpu.memory_space<smem>>) -> (i32, i32) {
    %c0_i32 = arith.constant 0 : i32
    %c0_i32_0 = arith.constant 0 : i32
    %c0_i32_1 = arith.constant 0 : i32
    return %c0_i32, %c0_i32_0 : i32, i32
  }
  func.func @transform_6(%arg0: i32, %arg1: i32, %arg2: memref<2xi32, #tpu.memory_space<smem>>) -> (i32, i32) {
    %c0_i32 = arith.constant 0 : i32
    %c0_i32_0 = arith.constant 0 : i32
    return %arg0, %c0_i32 : i32, i32
  }
}

</mosaic_0001>

<llo_original>
// kernel: tpu_custom_call.1
$region0: #{tpu_custom_call.1}
  #allocation0 [shape = 'u32[]', space=smem, size = 0x4, offset = 0x4, fixed_abs, tag = 'smem constant byte address 0x4 - core index']
  #allocation1 [shape = 'u32[72,128]{1,0:T(1,128)}', space=vmem, size = 0x9000, scoped, tag = 'internal scratch']
  #allocation2 [shape = 'f32[1,32]{1,0:T(1,128)}', space=vmem, size = 0x200, scoped, tag = 'scratch operand']
  #allocation3 [shape = 'f32[8,32]{1,0:T(8,128)}', space=vmem, size = 0x1000, scoped, tag = 'scratch operand']
  #allocation4 [shape = 'f32[8,32]{1,0:T(8,128)}', space=vmem, size = 0x1000, scoped, tag = 'scratch operand']
  #allocation5 [shape = 's32[1]{0}', space=sflag, size = 0x4, scoped, tag = 'scoped memory for tpu_custom_call.1']
  #allocation6 [shape = 'u8[512]{0}', space=smem, size = 0x200, scoped, tag = 'prefetched SMEM operand 0']
  %s0 = inlined_call_operand.vmem [shape: s32[2], index: 0, kind: input, shape index: {}]
  %s1 = inlined_call_operand.vmem [shape: f32[256,32], index: 1, kind: input, shape index: {}]
  %s2 = inlined_call_operand.vmem [shape: s32[1,256], index: 2, kind: input, shape index: {}]
  %s3 = inlined_call_operand.vmem [shape: f32[32,32], index: 3, kind: input, shape index: {}]
  %s4 = inlined_call_operand.vmem [shape: f32[1,32], index: 4, kind: input, shape index: {}]
  %s5 = inlined_call_operand.vmem [shape: f32[32,128], index: 5, kind: input, shape index: {}]
  %s6 = inlined_call_operand.vmem [shape: f32[1,128], index: 6, kind: input, shape index: {}]
  %s7 = inlined_call_operand.hbm [shape: f32[16,128], index: 7, kind: output, shape index: {}]
  %s8 = sld [smem:[#allocation0]]
  $region65: #{tpu_custom_call.1} parent=0
    _
  %s10 = ssub.s32 1, %s8
  %s11 = scalar_select 0, %s10, %s8
  %s13 = sshll.u32 %s0, 4
  %s14 = int_to_ptr.vmem [resolvable:$true] %s13
  %16 = dma.vmem_to_smem %s14, 16, [#allocation6], [#allocation5]
  %18 = dma.done [#allocation5], 16
  %19 = sfence
  $region1: #{tpu_custom_call.1} parent=0
    #allocation7 [shape = 'u8[8192]{0}', space=vmem, size = 0x2000, scoped, tag = 'output window, operand 0']
    #allocation8 [shape = 's32[2]{0}', space=sflag, size = 0x8, scoped, tag = 'scoped memory for tpu_custom_call.1']
    %20 = vsyncpa [#allocation8], 0
    %s21 = scalar_lea.sflag [#allocation8], 1
    %22 = vsyncpa %s21, 0
    loop: start=0, step=1, limit=4
    $region2: #{tpu_custom_call.1} parent=1 // loop_pre_header
      _
    $region3: #{tpu_custom_call.1} parent=1 // loop_header
      %s24 = sphi 0, %s28
      %p25 = scmp.ge.s32.totalorder %s24, 4
      %s31 = sphi 0, %s43
      %s32 = sphi 0, %s39
      %s33 = sphi 0, %s31
      %s34 = sphi 0, %s32
      %s35 = sphi 0, %s33
      %s36 = sphi 0, %s34
      %s50 = sphi 0, %s52
      %s53 = sphi 0, %s50
      %s54 = sphi 0, %s53
      %s70 = sphi 0, %s54
      %s80 = sphi 0, %s82
      %s83 = sphi 0, %s80
      %s84 = sphi 0, %s83
      %s100 = sphi 0, %s84
      %s104 = sphi 0, %s104
      %s106 = sphi 0, %s104
      %s107 = sphi 0, %s106
      %s121 = sphi 0, %s107
      %s125 = sphi 0, %s125
      %s127 = sphi 0, %s125
      %s128 = sphi 0, %s127
      %s142 = sphi 0, %s128
      %s146 = sphi 0, %s146
      %s148 = sphi 0, %s146
      %s149 = sphi 0, %s148
      %s163 = sphi 0, %s149
      %s167 = sphi 0, %s167
      %s169 = sphi 0, %s167
      %s170 = sphi 0, %s169
      %s184 = sphi 0, %s170
      %s190 = sphi 0, %s192
      %s193 = sphi 0, %s190
      %s194 = sphi 0, %s193
      %s210 = sphi 0, %s194
    $region4: #{tpu_custom_call.1} parent=1 // loop_header_branch
      %27 = sbr.rel (%p25) target = $region8
    $region5: #{tpu_custom_call.1} parent=1 // loop_body
      %s29 = ssub.s32 %s24, 1
      %s30 = ssub.s32 %s24, 2
      %s37 = sadd.s32 1, %s32
      %p38 = scmp.ge.s32.totalorder %s37, 1
      %s39 = scalar_select %p38, 0, %s37
      %s40 = sadd.s32 1, %s31
      %s41 = scalar_select %p38, %s40, %s31
      %p42 = scmp.ge.s32.totalorder %s41, 2
      %s43 = scalar_select %p42, 0, %s41
      %s44 = sld [smem:[#allocation6 + %s31]]
      %s45 = sadd.s32 %s44, %s32
      %s46 = sld [smem:[#allocation6 + %s43]]
      %s47 = sadd.s32 %s46, %s39
      %s48 = ssub.s32 %s45, %s47
      %p49 = scmp.eq.s32.totalorder %s48, 0
      %s51 = sadd.s32 %s50, 1
      %s52 = scalar_select %p49, %s50, %s51
      %p55 = pneg %p49
      %p56 = scmp.eq.s32.totalorder %s24, 1
      %p57 = por %p55, %p56
      %p58 = scmp.ne.s32.totalorder %s50, %s53
      %p59 = scmp.eq.s32.totalorder %s24, 0
      %p60 = por %p58, %p59
      %p61 = scmp.ne.s32.totalorder %s50, %s53
      %p62 = scmp.eq.s32.totalorder %s29, 1
      %p63 = por %p61, %p62
      %p64 = scmp.ne.s32.totalorder %s53, %s54
      %p65 = scmp.eq.s32.totalorder %s29, 0
      %p66 = por %p64, %p65
      %p67 = scmp.ne.s32.totalorder %s53, %s54
      %p68 = scmp.eq.s32.totalorder %s30, 1
      %p69 = por %p67, %p68
      %p71 = scmp.ne.s32.totalorder %s54, %s70
      %p72 = scmp.eq.s32.totalorder %s30, 0
      %p73 = por %p71, %p72
      %s74 = sld [smem:[#allocation6 + %s31]]
      %s75 = sadd.s32 %s74, %s32
      %s76 = sld [smem:[#allocation6 + %s43]]
      %s77 = sadd.s32 %s76, %s39
      %s78 = ssub.s32 %s75, %s77
      %p79 = scmp.eq.s32.totalorder %s78, 0
      %s81 = sadd.s32 %s80, 1
      %s82 = scalar_select %p79, %s80, %s81
      %p85 = pneg %p79
      %p86 = scmp.eq.s32.totalorder %s24, 1
      %p87 = por %p85, %p86
      %p88 = scmp.ne.s32.totalorder %s80, %s83
      %p89 = scmp.eq.s32.totalorder %s24, 0
      %p90 = por %p88, %p89
      %p91 = scmp.ne.s32.totalorder %s80, %s83
      %p92 = scmp.eq.s32.totalorder %s29, 1
      %p93 = por %p91, %p92
      %p94 = scmp.ne.s32.totalorder %s83, %s84
      %p95 = scmp.eq.s32.totalorder %s29, 0
      %p96 = por %p94, %p95
      %p97 = scmp.ne.s32.totalorder %s83, %s84
      %p98 = scmp.eq.s32.totalorder %s30, 1
      %p99 = por %p97, %p98
      %p101 = scmp.ne.s32.totalorder %s84, %s100
      %p102 = scmp.eq.s32.totalorder %s30, 0
      %p103 = por %p101, %p102
      %s105 = sadd.s32 %s104, 1
      %p108 = scmp.eq.s32.totalorder %s24, 1
      %p109 = scmp.ne.s32.totalorder %s104, %s106
      %p110 = scmp.eq.s32.totalorder %s24, 0
      %p111 = por %p109, %p110
      %p112 = scmp.ne.s32.totalorder %s104, %s106
      %p113 = scmp.eq.s32.totalorder %s29, 1
      %p114 = por %p112, %p113
      %p115 = scmp.ne.s32.totalorder %s106, %s107
      %p116 = scmp.eq.s32.totalorder %s29, 0
      %p117 = por %p115, %p116
      %p118 = scmp.ne.s32.totalorder %s106, %s107
      %p119 = scmp.eq.s32.totalorder %s30, 1
      %p120 = por %p118, %p119
      %p122 = scmp.ne.s32.totalorder %s107, %s121
      %p123 = scmp.eq.s32.totalorder %s30, 0
      %p124 = por %p122, %p123
      %s126 = sadd.s32 %s125, 1
      %p129 = scmp.eq.s32.totalorder %s24, 1
      %p130 = scmp.ne.s32.totalorder %s125, %s127
      %p131 = scmp.eq.s32.totalorder %s24, 0
      %p132 = por %p130, %p131
      %p133 = scmp.ne.s32.totalorder %s125, %s127
      %p134 = scmp.eq.s32.totalorder %s29, 1
      %p135 = por %p133, %p134
      %p136 = scmp.ne.s32.totalorder %s127, %s128
      %p137 = scmp.eq.s32.totalorder %s29, 0
      %p138 = por %p136, %p137
      %p139 = scmp.ne.s32.totalorder %s127, %s128
      %p140 = scmp.eq.s32.totalorder %s30, 1
      %p141 = por %p139, %p140
      %p143 = scmp.ne.s32.totalorder %s128, %s142
      %p144 = scmp.eq.s32.totalorder %s30, 0
      %p145 = por %p143, %p144
      %s147 = sadd.s32 %s146, 1
      %p150 = scmp.eq.s32.totalorder %s24, 1
      %p151 = scmp.ne.s32.totalorder %s146, %s148
      %p152 = scmp.eq.s32.totalorder %s24, 0
      %p153 = por %p151, %p152
      %p154 = scmp.ne.s32.totalorder %s146, %s148
      %p155 = scmp.eq.s32.totalorder %s29, 1
      %p156 = por %p154, %p155
      %p157 = scmp.ne.s32.totalorder %s148, %s149
      %p158 = scmp.eq.s32.totalorder %s29, 0
      %p159 = por %p157, %p158
      %p160 = scmp.ne.s32.totalorder %s148, %s149
      %p161 = scmp.eq.s32.totalorder %s30, 1
      %p162 = por %p160, %p161
      %p164 = scmp.ne.s32.totalorder %s149, %s163
      %p165 = scmp.eq.s32.totalorder %s30, 0
      %p166 = por %p164, %p165
      %s168 = sadd.s32 %s167, 1
      %p171 = scmp.eq.s32.totalorder %s24, 1
      %p172 = scmp.ne.s32.totalorder %s167, %s169
      %p173 = scmp.eq.s32.totalorder %s24, 0
      %p174 = por %p172, %p173
      %p175 = scmp.ne.s32.totalorder %s167, %s169
      %p176 = scmp.eq.s32.totalorder %s29, 1
      %p177 = por %p175, %p176
      %p178 = scmp.ne.s32.totalorder %s169, %s170
      %p179 = scmp.eq.s32.totalorder %s29, 0
      %p180 = por %p178, %p179
      %p181 = scmp.ne.s32.totalorder %s169, %s170
      %p182 = scmp.eq.s32.totalorder %s30, 1
      %p183 = por %p181, %p182
      %p185 = scmp.ne.s32.totalorder %s170, %s184
      %p186 = scmp.eq.s32.totalorder %s30, 0
      %p187 = por %p185, %p186
      %s188 = ssub.s32 %s31, %s43
      %p189 = scmp.eq.s32.totalorder %s188, 0
      %s191 = sadd.s32 %s190, 1
      %s192 = scalar_select %p189, %s190, %s191
      %p195 = pneg %p189
      %p196 = scmp.eq.s32.totalorder %s24, 1
      %p197 = por %p195, %p196
      %p198 = scmp.ne.s32.totalorder %s190, %s193
      %p199 = scmp.eq.s32.totalorder %s24, 0
      %p200 = por %p198, %p199
      %p201 = scmp.ne.s32.totalorder %s190, %s193
      %p202 = scmp.eq.s32.totalorder %s29, 1
      %p203 = por %p201, %p202
      %p204 = scmp.ne.s32.totalorder %s193, %s194
      %p205 = scmp.eq.s32.totalorder %s29, 0
      %p206 = por %p204, %p205
      %p207 = scmp.ne.s32.totalorder %s193, %s194
      %p208 = scmp.eq.s32.totalorder %s30, 1
      %p209 = por %p207, %p208
      %p211 = scmp.ne.s32.totalorder %s194, %s210
      %p212 = scmp.eq.s32.totalorder %s30, 0
      %p213 = por %p211, %p212
      %p214 = scmp.le.s32.totalorder 1, %s24
      %p215 = scmp.lt.s32.totalorder %s24, 3
      %p216 = pnand %p214, %p215
      %p217 = pneg %p216
      // Predicated region
      $region9: #{tpu_custom_call.1} parent=5 // pred_check
        _
      $region10: #{tpu_custom_call.1} parent=5 // pred_check_branch
        %219 = sbr.rel (%p216) target = $region12
      $region11: #{tpu_custom_call.1} parent=5 // pred_region
        %s220 = ssub.s32 %s24, 1
        // Predicated region
        $region13: #{tpu_custom_call.1} parent=11 // pred_check
          %p221 = pneg %p117
        $region14: #{tpu_custom_call.1} parent=11 // pred_check_branch
          %223 = sbr.rel (%p221) target = $region16
        $region15: #{tpu_custom_call.1} parent=11 // pred_region
          _
        $region16: #{tpu_custom_call.1} parent=11 // pred_fallthru
          _
        // Predicated region
        $region17: #{tpu_custom_call.1} parent=11 // pred_check
          %p224 = pneg %p138
        $region18: #{tpu_custom_call.1} parent=11 // pred_check_branch
          %226 = sbr.rel (%p224) target = $region20
        $region19: #{tpu_custom_call.1} parent=11 // pred_region
          _
        $region20: #{tpu_custom_call.1} parent=11 // pred_fallthru
          _
        // Predicated region
        $region21: #{tpu_custom_call.1} parent=11 // pred_check
          %p227 = pneg %p159
        $region22: #{tpu_custom_call.1} parent=11 // pred_check_branch
          %229 = sbr.rel (%p227) target = $region24
        $region23: #{tpu_custom_call.1} parent=11 // pred_region
          _
        $region24: #{tpu_custom_call.1} parent=11 // pred_fallthru
          _
        // Predicated region
        $region25: #{tpu_custom_call.1} parent=11 // pred_check
          %p230 = pneg %p180
        $region26: #{tpu_custom_call.1} parent=11 // pred_check_branch
          %232 = sbr.rel (%p230) target = $region28
        $region27: #{tpu_custom_call.1} parent=11 // pred_region
          _
        $region28: #{tpu_custom_call.1} parent=11 // pred_fallthru
          _
      $region12: #{tpu_custom_call.1} parent=5 // pred_fallthru
        _
      %p233 = scmp.lt.s32.totalorder %s24, 2
      // Predicated region
      $region29: #{tpu_custom_call.1} parent=5 // pred_check
        %p234 = pneg %p233
      $region30: #{tpu_custom_call.1} parent=5 // pred_check_branch
        %236 = sbr.rel (%p234) target = $region32
      $region31: #{tpu_custom_call.1} parent=5 // pred_region
        // Predicated region
        $region33: #{tpu_custom_call.1} parent=31 // pred_check
          %p237 = pneg %p60
        $region34: #{tpu_custom_call.1} parent=31 // pred_check_branch
          %239 = sbr.rel (%p237) target = $region36
        $region35: #{tpu_custom_call.1} parent=31 // pred_region
          %s240 = sld [smem:[#allocation6 + %s31]]
          %s241 = sadd.s32 %s240, %s32
          %s242 = smul.u32 16, %s241
          %p243 = scmp.lt.s32.totalorder %s242, 31
          %s244 = scalar_select %p243, %s242, 31
          %s245 = smul.addr %s244, 8
          %s246 = scalar_lea.vmem %s1, %s245
          %s247 = sld [smem:[#allocation6 + %s31]]
          %s248 = sadd.s32 %s247, %s32
          %s249 = smul.u32 16, %s248
        $region36: #{tpu_custom_call.1} parent=31 // pred_fallthru
          _
        // Predicated region
        $region37: #{tpu_custom_call.1} parent=31 // pred_check
          %p250 = pneg %p90
        $region38: #{tpu_custom_call.1} parent=31 // pred_check_branch
          %252 = sbr.rel (%p250) target = $region40
        $region39: #{tpu_custom_call.1} parent=31 // pred_region
          %s253 = sld [smem:[#allocation6 + %s31]]
          %s254 = sadd.s32 %s253, %s32
          %p255 = scmp.lt.s32.totalorder %s254, 1
          %s256 = scalar_select %p255, %s254, 1
          %s257 = scalar_lea.vmem %s2, %s256
          %s258 = sld [smem:[#allocation6 + %s31]]
          %s259 = sadd.s32 %s258, %s32
        $region40: #{tpu_custom_call.1} parent=31 // pred_fallthru
          _
      $region32: #{tpu_custom_call.1} parent=5 // pred_fallthru
        _
      %p260 = scmp.le.s32.totalorder 1, %s24
      %p261 = scmp.lt.s32.totalorder %s24, 3
      %p262 = pnand %p260, %p261
      %p263 = pneg %p262
      // Predicated region
      $region41: #{tpu_custom_call.1} parent=5 // pred_check
        _
      $region42: #{tpu_custom_call.1} parent=5 // pred_check_branch
        %265 = sbr.rel (%p262) target = $region44
      $region43: #{tpu_custom_call.1} parent=5 // pred_region
        %s266 = ssub.s32 %s24, 1
        %s267 = sld [smem:[#allocation6 + %s33]]
        %s268 = sadd.s32 %s267, %s34
        %s269 = smul.u32 16, %s268
        %p270 = scmp.lt.s32.totalorder %s269, 31
        %s271 = scalar_select %p270, %s269, 31
        %s272 = smul.addr %s271, 8
        %s273 = scalar_lea.vmem %s1, %s272
        %p274 = pneg %p66
        %p275 = pneg %p63
        %s276 = sld [smem:[#allocation6 + %s33]]
        %s277 = sadd.s32 %s276, %s34
        %p278 = scmp.lt.s32.totalorder %s277, 1
        %s279 = scalar_select %p278, %s277, 1
        %s280 = scalar_lea.vmem %s2, %s279
        %p281 = pneg %p96
        %p282 = pneg %p93
        %p283 = pneg %p117
        %p284 = pneg %p114
        %p285 = pneg %p138
        %p286 = pneg %p135
        %p287 = pneg %p159
        %p288 = pneg %p156
        %p289 = pneg %p180
        %p290 = pneg %p177
        %p291 = pneg %p206
        %p292 = pneg %p203
        %s293 = sand.u32 %s193, 1
        %s294 = scalar_lea.sflag [#allocation8], %s293
        %s295 = sand.u32 %s193, 1
        %s296 = smul.addr %s295, 8
        %s297 = scalar_lea.vmem [#allocation7], %s296
        %s298 = sld [smem:[#allocation6 + %s33]]
        %s299 = sadd.s32 %s298, %s34
        %s300 = smul.u32 16, %s299
        %p301 = scmp.lt.s32.totalorder %s300, 31
        %s302 = scalar_select %p301, %s300, 31
        %s303 = smul.addr %s302, 8
        %s304 = scalar_lea.vmem %s1, %s303
        %s305 = sld [smem:[#allocation6 + %s33]]
        %s306 = sadd.s32 %s305, %s34
        %s307 = smul.u32 16, %s306
        %s308 = sld [smem:[#allocation6 + %s33]]
        %s309 = sadd.s32 %s308, %s34
        %p310 = scmp.lt.s32.totalorder %s309, 1
        %s311 = scalar_select %p310, %s309, 1
        %s312 = scalar_lea.vmem %s2, %s311
        %s313 = sld [smem:[#allocation6 + %s33]]
        %s314 = sadd.s32 %s313, %s34
        %p315 = scmp.eq.s32.totalorder %s34, 0
        // Predicated region
        $region45: #{tpu_custom_call.1} parent=43 // pred_check
          %p316 = pneg %p315
        $region46: #{tpu_custom_call.1} parent=43 // pred_check_branch
          %318 = sbr.rel (%p316) target = $region48
        $region47: #{tpu_custom_call.1} parent=43 // pred_region
          %vm319 = vcmask 253952
          %320 = vst.msk [vmem:[#allocation2] sm:$0x1] %vm319, 0.0
          %vm321 = vcmask 261120
          %322 = vst.msk [vmem:[#allocation3] sm:$0xff] %vm321, 0.0
          %323 = vst.msk [vmem:[#allocation4] sm:$0xff] %vm321, 0.0
        $region48: #{tpu_custom_call.1} parent=43 // pred_fallthru
          _
        %v324 = vld [vmem:[%s304] sm:$0xff]
        %v325 = vld [vmem:[%s304 + $0x8] sm:$0xff]
        %v326 = vld [vmem:[%s304 + $0x10] sm:$0xff]
        %v327 = vld [vmem:[%s304 + $0x18] sm:$0xff]
        %v328 = vld [vmem:[%s304 + $0x20] sm:$0xff]
        %v329 = vld [vmem:[%s304 + $0x28] sm:$0xff]
        %v330 = vld [vmem:[%s304 + $0x30] sm:$0xff]
        %v331 = vld [vmem:[%s304 + $0x38] sm:$0xff]
        %v332 = vld [vmem:[%s304 + $0x40] sm:$0xff]
        %v333 = vld [vmem:[%s304 + $0x48] sm:$0xff]
        %v334 = vld [vmem:[%s304 + $0x50] sm:$0xff]
        %v335 = vld [vmem:[%s304 + $0x58] sm:$0xff]
        %v336 = vld [vmem:[%s304 + $0x60] sm:$0xff]
        %v337 = vld [vmem:[%s304 + $0x68] sm:$0xff]
        %v338 = vld [vmem:[%s304 + $0x70] sm:$0xff]
        %v339 = vld [vmem:[%s304 + $0x78] sm:$0xff]
        %v340 = vld [vmem:[%s3] sm:$0xff]
        %v341 = vld [vmem:[%s3 + $0x8] sm:$0xff]
        %v342 = vld [vmem:[%s3 + $0x10] sm:$0xff]
        %v343 = vld [vmem:[%s3 + $0x18] sm:$0xff]
        %v344 = vld [vmem:[%s4] sm:$0x1]
        %v346 = vperm.slane %v344, 0
        %vm348 = vcmask 261120
        %v350 = vsel %vm348, %v324, 0
        %v353 = vsel %vm348, %v325, 0
        %v356 = vsel %vm348, %v326, 0
        %v359 = vsel %vm348, %v327, 0
        %v362 = vsel %vm348, %v328, 0
        %v365 = vsel %vm348, %v329, 0
        %v368 = vsel %vm348, %v330, 0
        %v371 = vsel %vm348, %v331, 0
        %v374 = vsel %vm348, %v332, 0
        %v377 = vsel %vm348, %v333, 0
        %v380 = vsel %vm348, %v334, 0
        %v383 = vsel %vm348, %v335, 0
        %v386 = vsel %vm348, %v336, 0
        %v389 = vsel %vm348, %v337, 0
        %v392 = vsel %vm348, %v338, 0
        %v395 = vsel %vm348, %v339, 0
        %397 = vmatpush.msra.mxu0 0.0
        %398 = vmatpush.msra.mxu0 0.0
        %399 = vmatpush.msra.mxu0 0.0
        %400 = vmatpush.msra.mxu0 0.0
        %401 = vmatpush.msra.mxu0 0.0
        %402 = vmatpush.msra.mxu0 0.0
        %403 = vmatpush.msra.mxu0 0.0
        %404 = vmatpush.msra.mxu0 0.0
        %405 = vmatpush.msra.mxu0 0.0
        %406 = vmatpush.msra.mxu0 0.0
        %407 = vmatpush.msra.mxu0 0.0
        %408 = vmatpush.msra.mxu0 0.0
        %409 = vmatpush.msra.mxu0 %v343
        %410 = vmatpush.msra.mxu0 %v342
        %411 = vmatpush.msra.mxu0 %v341
        %412 = vmatpush.msra.mxu0 %v340
        %413 = vmatmul.f32.gmra.mxu0 %v350
        %v414 = vpop.f32.mrf.mxu0
        %v415 = vadd.f32 %v346, %v414
        %416 = vmatmul.f32.gmra.mxu0 %v353
        %v417 = vpop.f32.mrf.mxu0
        %v418 = vadd.f32 %v346, %v417
        %419 = vmatmul.f32.gmra.mxu0 %v356
        %v420 = vpop.f32.mrf.mxu0
        %v421 = vadd.f32 %v346, %v420
        %422 = vmatmul.f32.gmra.mxu0 %v359
        %v423 = vpop.f32.mrf.mxu0
        %v424 = vadd.f32 %v346, %v423
        %425 = vmatmul.f32.gmra.mxu0 %v362
        %v426 = vpop.f32.mrf.mxu0
        %v427 = vadd.f32 %v346, %v426
        %428 = vmatmul.f32.gmra.mxu0 %v365
        %v429 = vpop.f32.mrf.mxu0
        %v430 = vadd.f32 %v346, %v429
        %431 = vmatmul.f32.gmra.mxu0 %v368
        %v432 = vpop.f32.mrf.mxu0
        %v433 = vadd.f32 %v346, %v432
        %434 = vmatmul.f32.gmra.mxu0 %v371
        %v435 = vpop.f32.mrf.mxu0
        %v436 = vadd.f32 %v346, %v435
        %437 = vmatmul.f32.gmra.mxu0 %v374
        %v438 = vpop.f32.mrf.mxu0
        %v439 = vadd.f32 %v346, %v438
        %440 = vmatmul.f32.gmra.mxu0 %v377
        %v441 = vpop.f32.mrf.mxu0
        %v442 = vadd.f32 %v346, %v441
        %443 = vmatmul.f32.gmra.mxu0 %v380
        %v444 = vpop.f32.mrf.mxu0
        %v445 = vadd.f32 %v346, %v444
        %446 = vmatmul.f32.gmra.mxu0 %v383
        %v447 = vpop.f32.mrf.mxu0
        %v448 = vadd.f32 %v346, %v447
        %449 = vmatmul.f32.gmra.mxu0 %v386
        %v450 = vpop.f32.mrf.mxu0
        %v451 = vadd.f32 %v346, %v450
        %452 = vmatmul.f32.gmra.mxu0 %v389
        %v453 = vpop.f32.mrf.mxu0
        %v454 = vadd.f32 %v346, %v453
        %455 = vmatmul.f32.gmra.mxu0 %v392
        %v456 = vpop.f32.mrf.mxu0
        %v457 = vadd.f32 %v346, %v456
        %458 = vmatmul.f32.gmra.mxu0 %v395
        %v459 = vpop.f32.mrf.mxu0
        %v460 = vadd.f32 %v346, %v459
        %461 = vdwg.mxu0
        %v462 = vmax.f32 %v415, 0.0
        %v463 = vmax.f32 %v418, 0.0
        %v464 = vmax.f32 %v421, 0.0
        %v465 = vmax.f32 %v424, 0.0
        %v466 = vmax.f32 %v427, 0.0
        %v467 = vmax.f32 %v430, 0.0
        %v468 = vmax.f32 %v433, 0.0
        %v469 = vmax.f32 %v436, 0.0
        %v470 = vmax.f32 %v439, 0.0
        %v471 = vmax.f32 %v442, 0.0
        %v472 = vmax.f32 %v445, 0.0
        %v473 = vmax.f32 %v448, 0.0
        %v474 = vmax.f32 %v451, 0.0
        %v475 = vmax.f32 %v454, 0.0
        %v476 = vmax.f32 %v457, 0.0
        %v477 = vmax.f32 %v460, 0.0
        %v478 = vsel %vm348, %v462, -inf
        %v479 = vsel %vm348, %v463, -inf
        %v480 = vsel %vm348, %v464, -inf
        %v481 = vsel %vm348, %v465, -inf
        %v482 = vsel %vm348, %v466, -inf
        %v483 = vmax.f32 %v478, %v482
        %v484 = vsel %vm348, %v467, -inf
        %v485 = vmax.f32 %v479, %v484
        %v486 = vsel %vm348, %v468, -inf
        %v487 = vmax.f32 %v480, %v486
        %v488 = vsel %vm348, %v469, -inf
        %v489 = vmax.f32 %v481, %v488
        %v490 = vsel %vm348, %v470, -inf
        %v491 = vmax.f32 %v483, %v490
        %v492 = vsel %vm348, %v471, -inf
        %v493 = vmax.f32 %v485, %v492
        %v494 = vsel %vm348, %v472, -inf
        %v495 = vmax.f32 %v487, %v494
        %v496 = vsel %vm348, %v473, -inf
        %v497 = vmax.f32 %v489, %v496
        %v498 = vsel %vm348, %v474, -inf
        %v499 = vmax.f32 %v491, %v498
        %v500 = vsel %vm348, %v475, -inf
        %v501 = vmax.f32 %v493, %v500
        %v502 = vsel %vm348, %v476, -inf
        %v503 = vmax.f32 %v495, %v502
        %v504 = vsel %vm348, %v477, -inf
        %v505 = vmax.f32 %v497, %v504
        %v506 = vmax.f32 %v499, %v501
        %v507 = vmax.f32 %v503, %v505
        %v508 = vmax.f32 %v506, %v507
        %v509 = vrot.slane %v508, 4
        %v510 = vmax.f32 %v508, %v509
        %v511 = vrot.slane %v510, 2
        %v512 = vmax.f32 %v510, %v511
        %v513 = vrot.slane %v512, 1
        %v514 = vmax.f32 %v512, %v513
        %v515 = vld [vmem:[#allocation2] sm:$0x1]
        %v516 = vmax.f32 %v515, %v514
        %v517 = vsub.f32 %v515, %v516
        %v518 = vmul.f32 %v517, 1.442695
        %v519 = vpow.pop %v518
        %vm520 = vcmask 253952
        %521 = vst.msk [vmem:[#allocation2] sm:$0x1] %vm520, %v516
        %v523 = vperm.slane %v516, 0
        %v525 = vsub.f32 %v462, %v523
        %v526 = vsub.f32 %v463, %v523
        %v527 = vsub.f32 %v464, %v523
        %v528 = vsub.f32 %v465, %v523
        %v529 = vsub.f32 %v466, %v523
        %v530 = vsub.f32 %v467, %v523
        %v531 = vsub.f32 %v468, %v523
        %v532 = vsub.f32 %v469, %v523
        %v533 = vsub.f32 %v470, %v523
        %v534 = vsub.f32 %v471, %v523
        %v535 = vsub.f32 %v472, %v523
        %v536 = vsub.f32 %v473, %v523
        %v537 = vsub.f32 %v474, %v523
        %v538 = vsub.f32 %v475, %v523
        %v539 = vsub.f32 %v476, %v523
        %v540 = vsub.f32 %v477, %v523
        %v541 = vmul.f32 %v525, 1.442695
        %v542 = vpow.pop %v541
        %v543 = vmul.f32 %v526, 1.442695
        %v544 = vpow.pop %v543
        %v545 = vmul.f32 %v527, 1.442695
        %v546 = vpow.pop %v545
        %v547 = vmul.f32 %v528, 1.442695
        %v548 = vpow.pop %v547
        %v549 = vmul.f32 %v529, 1.442695
        %v550 = vpow.pop %v549
        %v551 = vmul.f32 %v530, 1.442695
        %v552 = vpow.pop %v551
        %v553 = vmul.f32 %v531, 1.442695
        %v554 = vpow.pop %v553
        %v555 = vmul.f32 %v532, 1.442695
        %v556 = vpow.pop %v555
        %v557 = vmul.f32 %v533, 1.442695
        %v558 = vpow.pop %v557
        %v559 = vmul.f32 %v534, 1.442695
        %v560 = vpow.pop %v559
        %v561 = vmul.f32 %v535, 1.442695
        %v562 = vpow.pop %v561
        %v563 = vmul.f32 %v536, 1.442695
        %v564 = vpow.pop %v563
        %v565 = vmul.f32 %v537, 1.442695
        %v566 = vpow.pop %v565
        %v567 = vmul.f32 %v538, 1.442695
        %v568 = vpow.pop %v567
        %v569 = vmul.f32 %v539, 1.442695
        %v570 = vpow.pop %v569
        %v571 = vmul.f32 %v540, 1.442695
        %v572 = vpow.pop %v571
        %s573 = smul.u32 %s33, 8
        %v574 = vlaneseq
        %v575 = vshrl.u32 %v574, 7
        %v576 = vstv %s573
        %v577 = vadd.s32 %v575, %v576
        %v578 = vld [vmem:[%s312] sm:$0x1]
        %v579 = vperm.slane %v578, 0
        %vm580 = vcmp.eq.s32.totalorder %v577, %v579
        %v581 = vsel %vm580, 1, 0
        %v582 = vcvt.s32.f32 %v581
        %v583 = vmul.f32 %v542, %v324
        %v584 = vmul.f32 %v544, %v325
        %v585 = vmul.f32 %v546, %v326
        %v586 = vmul.f32 %v548, %v327
        %v587 = vmul.f32 %v550, %v328
        %v588 = vmul.f32 %v552, %v329
        %v589 = vmul.f32 %v554, %v330
        %v590 = vmul.f32 %v556, %v331
        %v591 = vmul.f32 %v558, %v332
        %v592 = vmul.f32 %v560, %v333
        %v593 = vmul.f32 %v562, %v334
        %v594 = vmul.f32 %v564, %v335
        %v595 = vmul.f32 %v566, %v336
        %v596 = vmul.f32 %v568, %v337
        %v597 = vmul.f32 %v570, %v338
        %v598 = vmul.f32 %v572, %v339
        %615 = vrot.lane.b32.xlu0 %v583, 32
        %v616 = vpop.permute.xlu0 %615
        %617 = vrot.lane.b32.xlu0 %v584, 32
        %v618 = vpop.permute.xlu0 %617
        %619 = vrot.lane.b32.xlu0 %v585, 32
        %v620 = vpop.permute.xlu0 %619
        %621 = vrot.lane.b32.xlu0 %v586, 32
        %v622 = vpop.permute.xlu0 %621
        %623 = vrot.lane.b32.xlu0 %v587, 32
        %v624 = vpop.permute.xlu0 %623
        %625 = vrot.lane.b32.xlu0 %v588, 32
        %v626 = vpop.permute.xlu0 %625
        %627 = vrot.lane.b32.xlu0 %v589, 32
        %v628 = vpop.permute.xlu0 %627
        %629 = vrot.lane.b32.xlu0 %v590, 32
        %v630 = vpop.permute.xlu0 %629
        %631 = vrot.lane.b32.xlu0 %v591, 32
        %v632 = vpop.permute.xlu0 %631
        %633 = vrot.lane.b32.xlu0 %v592, 32
        %v634 = vpop.permute.xlu0 %633
        %635 = vrot.lane.b32.xlu0 %v593, 32
        %v636 = vpop.permute.xlu0 %635
        %637 = vrot.lane.b32.xlu0 %v594, 32
        %v638 = vpop.permute.xlu0 %637
        %639 = vrot.lane.b32.xlu0 %v595, 32
        %v640 = vpop.permute.xlu0 %639
        %641 = vrot.lane.b32.xlu0 %v596, 32
        %v642 = vpop.permute.xlu0 %641
        %643 = vrot.lane.b32.xlu0 %v597, 32
        %v644 = vpop.permute.xlu0 %643
        %645 = vrot.lane.b32.xlu0 %v598, 32
        %v646 = vpop.permute.xlu0 %645
        %v663 = vsel %vm348, %v542, %v616
        %v664 = vsel %vm348, %v544, %v618
        %v665 = vsel %vm348, %v546, %v620
        %v666 = vsel %vm348, %v548, %v622
        %v667 = vsel %vm348, %v550, %v624
        %v668 = vsel %vm348, %v552, %v626
        %v669 = vsel %vm348, %v554, %v628
        %v670 = vsel %vm348, %v556, %v630
        %v671 = vsel %vm348, %v558, %v632
        %v672 = vsel %vm348, %v560, %v634
        %v673 = vsel %vm348, %v562, %v636
        %v674 = vsel %vm348, %v564, %v638
        %v675 = vsel %vm348, %v566, %v640
        %v676 = vsel %vm348, %v568, %v642
        %v677 = vsel %vm348, %v570, %v644
        %v678 = vsel %vm348, %v572, %v646
        %679 = vmatpush.msra.mxu0 %v678
        %680 = vmatpush.msra.mxu0 %v677
        %681 = vmatpush.msra.mxu0 %v676
        %682 = vmatpush.msra.mxu0 %v675
        %683 = vmatpush.msra.mxu0 %v674
        %684 = vmatpush.msra.mxu0 %v673
        %685 = vmatpush.msra.mxu0 %v672
        %686 = vmatpush.msra.mxu0 %v671
        %687 = vmatpush.msra.mxu0 %v670
        %688 = vmatpush.msra.mxu0 %v669
        %689 = vmatpush.msra.mxu0 %v668
        %690 = vmatpush.msra.mxu0 %v667
        %691 = vmatpush.msra.mxu0 %v666
        %692 = vmatpush.msra.mxu0 %v665
        %693 = vmatpush.msra.mxu0 %v664
        %694 = vmatpush.msra.mxu0 %v663
        %695 = vmatmul.f32.gmra.mxu0 %v582
        %v696 = vpop.f32.mrf.mxu0
        %v697 = vadd.f32 0.0, %v696
        %698 = vdwg.mxu0
        %v699 = vld [vmem:[#allocation3] sm:$0xff]
        %v701 = vperm.slane %v519, 0
        %v703 = vmul.f32 %v701, %v699
        %v704 = vadd.f32 %v703, %v697
        %705 = vst.msk [vmem:[#allocation3] sm:$0xff] %vm348, %v704
        %v706 = vld [vmem:[#allocation4] sm:$0xff]
        %v707 = vmul.f32 %v701, %v706
        %709 = vrot.lane.b32.xlu0 %v697, 96
        %v710 = vpop.permute.xlu0 %709
        %v712 = vadd.f32 %v707, %v710
        %713 = vst.msk [vmem:[#allocation4] sm:$0xff] %vm348, %v712
        // Predicated region
        $region49: #{tpu_custom_call.1} parent=43 // pred_check
          %p714 = pneg %p315
        $region50: #{tpu_custom_call.1} parent=43 // pred_check_branch
          %716 = sbr.rel (%p714) target = $region52
        $region51: #{tpu_custom_call.1} parent=43 // pred_region
          %v717 = vld [vmem:[#allocation3] sm:$0xff]
          %v718 = vrcp.pop %v717
          %v719 = vmul.f32 %v717, %v718
          %v720 = vsub.f32 2.0, %v719
          %v721 = vmul.f32 %v718, %v720
          %vm722 = vcmp.gt.f32.partialorder %v717, 0.0
          %v723 = vld [vmem:[#allocation4] sm:$0xff]
          %v724 = vmul.f32 %v723, %v721
          %v725 = vsel %vm722, %v724, 0.0
          %v726 = vld [vmem:[%s5] sm:$0xff]
          %v727 = vld [vmem:[%s5 + $0x8] sm:$0xff]
          %v728 = vld [vmem:[%s5 + $0x10] sm:$0xff]
          %v729 = vld [vmem:[%s5 + $0x18] sm:$0xff]
          %v730 = vld [vmem:[%s6] sm:$0x1]
          %v732 = vperm.slane %v730, 0
          %v735 = vsel %vm348, %v725, 0
          %737 = vmatpush.msra.mxu0 0.0
          %738 = vmatpush.msra.mxu0 0.0
          %739 = vmatpush.msra.mxu0 0.0
          %740 = vmatpush.msra.mxu0 0.0
          %741 = vmatpush.msra.mxu0 0.0
          %742 = vmatpush.msra.mxu0 0.0
          %743 = vmatpush.msra.mxu0 0.0
          %744 = vmatpush.msra.mxu0 0.0
          %745 = vmatpush.msra.mxu0 0.0
          %746 = vmatpush.msra.mxu0 0.0
          %747 = vmatpush.msra.mxu0 0.0
          %748 = vmatpush.msra.mxu0 0.0
          %749 = vmatpush.msra.mxu0 %v729
          %750 = vmatpush.msra.mxu0 %v728
          %751 = vmatpush.msra.mxu0 %v727
          %752 = vmatpush.msra.mxu0 %v726
          %753 = vmatmul.f32.gmra.mxu0 %v735
          %v754 = vpop.f32.mrf.mxu0
          %v755 = vadd.f32 %v732, %v754
          %756 = vdwg.mxu0
          %757 = vst [vmem:[%s297] sm:$0xff] %v755
        $region52: #{tpu_custom_call.1} parent=43 // pred_fallthru
          _
        %s758 = sand.u32 %s193, 1
        %s759 = scalar_lea.sflag [#allocation8], %s758
        %s760 = sand.u32 %s193, 1
        %s761 = smul.addr %s760, 8
        %s762 = scalar_lea.vmem [#allocation7], %s761
        // Predicated region
        $region53: #{tpu_custom_call.1} parent=43 // pred_check
          %p763 = pneg %p203
        $region54: #{tpu_custom_call.1} parent=43 // pred_check_branch
          %765 = sbr.rel (%p763) target = $region56
        $region55: #{tpu_custom_call.1} parent=43 // pred_region
          %767 = vsyncadd %s759, 0
          %s768 = smul.addr %s33, 8
          %s769 = scalar_lea.hbm %s7, %s768
          %s771 = sshll.u32 %s762, 4
          %s772 = int_to_ptr.vmem [resolvable:$true] %s771
          %s773 = sshll.u32 %s769, 4
          %s774 = int_to_ptr.hbm [resolvable:$true] %s773
          %776 = dma.vmem_to_hbm [thread:$0]  %s772, 128, %s774, %s759
        $region56: #{tpu_custom_call.1} parent=43 // pred_fallthru
          _
      $region44: #{tpu_custom_call.1} parent=5 // pred_fallthru
        _
      %p777 = scmp.le.s32.totalorder 2, %s24
      // Predicated region
      $region57: #{tpu_custom_call.1} parent=5 // pred_check
        %p778 = pneg %p777
      $region58: #{tpu_custom_call.1} parent=5 // pred_check_branch
        %780 = sbr.rel (%p778) target = $region60
      $region59: #{tpu_custom_call.1} parent=5 // pred_region
        %s781 = ssub.s32 %s24, 2
        // Predicated region
        $region61: #{tpu_custom_call.1} parent=59 // pred_check
          %p782 = pneg %p209
        $region62: #{tpu_custom_call.1} parent=59 // pred_check_branch
          %784 = sbr.rel (%p782) target = $region64
        $region63: #{tpu_custom_call.1} parent=59 // pred_region
          %s785 = sand.u32 %s194, 1
          %s786 = scalar_lea.sflag [#allocation8], %s785
          %s787 = sand.u32 %s194, 1
          %s788 = smul.addr %s787, 8
          %s789 = scalar_lea.vmem [#allocation7], %s788
          %791 = dma.done %s786, 128
        $region64: #{tpu_custom_call.1} parent=59 // pred_fallthru
          _
      $region60: #{tpu_custom_call.1} parent=5 // pred_fallthru
        _
    $region6: #{tpu_custom_call.1} parent=1 // loop_footer
      %s28 = sadd.s32 1, %s24
    $region7: #{tpu_custom_call.1} parent=1 // loop_footer_branch
      %23 = sbr.rel target = $region3
    $region8: #{tpu_custom_call.1} parent=1 // loop_exit
      _
    %792 = vsyncpa [#allocation8], 1
    %s793 = scalar_lea.sflag [#allocation8], 1
    %794 = vsyncpa %s793, 1

</llo_original>
